<compile_context>
chip_gen: v7x
topology: tpu7x:2x2x1
jax: 0.10.0
libtpu: 0.0.40
codegen_flags: <defaults>
</compile_context>

<pallas_src>
import functools

import jax
import jax.numpy as jnp
from jax.experimental import pallas as pl
from jax.experimental.pallas import tpu as pltpu

_LANES = 128
_DATA_VMEM_BUDGET = 32 * 1024 * 1024  # double-buffered in + out tile data
_VMEM_LIMIT = 48 * 1024 * 1024        # < 64 MiB/TC on v7x; plenty of headroom on v5e/v6e


def _mul_kernel(x_ref, o_ref, *, scale):
    # Pure VPU elementwise multiply on the whole VMEM tile.  Multiply natively
    # in the output dtype (float in == float out; int/bool inputs promoted to
    # f32, matching torch's `int_tensor * python_float`).
    o_ref[...] = x_ref[...].astype(o_ref.dtype) * jnp.asarray(scale, o_ref.dtype)


def _sublane_granule(in_dtype, out_dtype):
    in_item = jnp.dtype(in_dtype).itemsize
    out_item = jnp.dtype(out_dtype).itemsize
    return max(8, 32 // in_item, 32 // out_item)


def _mul_2d(x2d, scale, out_dtype, sublanes):
    """Run the kernel on a lane-dense (rows, C) slab (rows % sublanes == 0)."""
    rows, C = x2d.shape
    in_item = jnp.dtype(x2d.dtype).itemsize
    out_item = jnp.dtype(out_dtype).itemsize

    # Block sized so double-buffered in+out tiles stay within the data budget
    # (~8 MiB f32 input tiles: per-grid-step overhead (~0.35us) is noise even
    # at v7x's 3.2 TB/s HBM bandwidth).
    per_row_bytes = 2 * C * (in_item + out_item)
    block_rows = max(sublanes,
                     (_DATA_VMEM_BUDGET // per_row_bytes) // sublanes * sublanes)
    block_rows = min(block_rows, rows)

    # Prefer an even number of near-equal blocks so the "parallel" grid axis
    # splits evenly across v7x's two TensorCores.
    nblocks = pl.cdiv(rows, block_rows)
    if rows > sublanes:
        if nblocks % 2:
            nblocks += 1
        block_rows = max(sublanes,
                         pl.cdiv(pl.cdiv(rows, nblocks), sublanes) * sublanes)
        while block_rows > sublanes and pl.cdiv(rows, block_rows) % 2:
            block_rows -= sublanes

    grid = (pl.cdiv(rows, block_rows),)

    return pl.pallas_call(
        functools.partial(_mul_kernel, scale=scale),
        out_shape=jax.ShapeDtypeStruct((rows, C), out_dtype),
        grid_spec=pltpu.PrefetchScalarGridSpec(
            num_scalar_prefetch=0,
            grid=grid,
            in_specs=[pl.BlockSpec((block_rows, C), lambda i: (i, 0))],
            out_specs=pl.BlockSpec((block_rows, C), lambda i: (i, 0)),
        ),
        compiler_params=pltpu.CompilerParams(
            dimension_semantics=("parallel",),
            vmem_limit_bytes=_VMEM_LIMIT,
        ),
    )(x2d)


def mul_pallas(x: jax.Array, scale: float) -> jax.Array:
    """Elementwise x * scale (PyTorch `Mul.forward`) as a Pallas TPU kernel."""
    orig_shape = x.shape
    in_dtype = x.dtype
    out_dtype = in_dtype if jnp.issubdtype(in_dtype, jnp.floating) else jnp.float32
    scale = float(scale)

    n = x.size
    sublanes = _sublane_granule(in_dtype, out_dtype)
    granule = sublanes * _LANES

    x_flat = x.reshape(-1)
    n_main = (n // granule) * granule

    if n_main == 0:
        # Tiny input (< one (sublanes, 128) tile): pad to a single tile, one
        # kernel block, slice back.  All costs are negligible at this size.
        x_pad = jnp.pad(x_flat, (0, granule - n))
        out2d = _mul_2d(x_pad.reshape(sublanes, _LANES), scale, out_dtype, sublanes)
        return out2d.reshape(-1)[:n].reshape(orig_shape)

    # Lane-dense 2-D view: widest C (multiple of 128, up to 8192) that keeps
    # rows a multiple of the sublane granule -> wide unmasked vector stores.
    m = n_main // granule
    k = 1
    for cand in (64, 32, 16, 8, 4, 2):
        if m % cand == 0:
            k = cand
            break
    C = k * _LANES
    rows = n_main // C

    if n_main == n:
        # Fast path (all real airbench activation shapes): zero pad/slice
        # copies, pure 2-pass HBM streaming.
        out2d = _mul_2d(x_flat.reshape(rows, C), scale, out_dtype, sublanes)
        return out2d.reshape(orig_shape)

    # Unaligned tail (< granule elements): kernel on the aligned prefix, tiny
    # plain-JAX multiply on the remainder, stitch together.  Avoids the old
    # full-array pad + full-array slice round trips.
    # TODO(synk): a fully copy-free unaligned path needs memory_space=pl.ANY
    # plus manual masked DMA of the ragged last tile.
    main_out = _mul_2d(x_flat[:n_main].reshape(rows, C), scale, out_dtype, sublanes)
    tail_out = x_flat[n_main:].astype(out_dtype) * jnp.asarray(scale, out_dtype)
    out_flat = jnp.concatenate([main_out.reshape(-1), tail_out])
    return out_flat.reshape(orig_shape)


if __name__ == "__main__":
    key = jax.random.PRNGKey(0)
    scale = 1.0 / 9.0  # deterministic scale constant (like Mul(1/9) in airbench)

    # Small NCHW input consistent with airbench-style conv activations
    # (aligned fast path: 2*4*16*16 = 2048 elements).
    x = jax.random.normal(key, (2, 4, 16, 16), dtype=jnp.float32)
    y = jax.block_until_ready(mul_pallas(x, scale))
    y_ref = x * scale
    assert y.shape == x.shape and y.dtype == x.dtype
    assert jnp.allclose(y, y_ref, atol=1e-6, rtol=1e-6)

    # Unaligned size (exercises aligned-prefix + plain-JAX tail path).
    x2 = jax.random.normal(jax.random.PRNGKey(1), (1, 9, 13, 17), dtype=jnp.float32)
    y2 = jax.block_until_ready(mul_pallas(x2, scale))
    assert y2.shape == x2.shape and y2.dtype == x2.dtype
    assert jnp.allclose(y2, x2 * scale, atol=1e-6, rtol=1e-6)

    print("KERNEL_OK")
</pallas_src>

<mosaic_0001>
module attributes {stable_mosaic.version = 11 : i64} {
  func.func @_mul_kernel(%arg0: i32, %arg1: memref<8x256xf32, #tpu.memory_space<vmem>>, %arg2: memref<8x256xf32, #tpu.memory_space<vmem>>) attributes {dimension_semantics = [#tpu.dimension_semantics<parallel>], iteration_bounds = array<i64: 1>, scalar_prefetch = 0 : i64, scratch_operands = 0 : i64, tpu.core_type = #tpu.core_type<tc>, window_params = [{transform_indices = @transform_0, window_bounds = array<i64: 8, 256>}, {transform_indices = @transform_1, window_bounds = array<i64: 8, 256>}]} {
    %c0 = arith.constant 0 : index
    %c0_0 = arith.constant 0 : index
    %0 = vector.load %arg1[%c0, %c0_0] : memref<8x256xf32, #tpu.memory_space<vmem>>, vector<8x256xf32>
    %cst = arith.constant 0.111111112 : f32
    %1 = vector.broadcast %cst : f32 to vector<8x256xf32>
    %2 = arith.mulf %0, %1 : vector<8x256xf32>
    %c0_1 = arith.constant 0 : index
    %c0_2 = arith.constant 0 : index
    %3 = vector.load %arg2[%c0_1, %c0_2] : memref<8x256xf32, #tpu.memory_space<vmem>>, vector<8x256xf32>
    tpu.vector_store %arg2[%c0_1, %c0_2], %2 {strides = array<i32>} : memref<8x256xf32, #tpu.memory_space<vmem>>, vector<8x256xf32>,
    return
  }
  func.func @transform_0(%arg0: i32) -> (i32, i32) {
    %c0_i32 = arith.constant 0 : i32
    %c0_i32_0 = arith.constant 0 : i32
    return %arg0, %c0_i32 : i32, i32
  }
  func.func @transform_1(%arg0: i32) -> (i32, i32) {
    %c0_i32 = arith.constant 0 : i32
    %c0_i32_0 = arith.constant 0 : i32
    return %arg0, %c0_i32 : i32, i32
  }
}

</mosaic_0001>

<llo_original>
// kernel: tpu_custom_call.1
$region0: #{tpu_custom_call.1}
  #allocation0 [shape = 'u32[]', space=smem, size = 0x4, offset = 0x4, fixed_abs, tag = 'smem constant byte address 0x4 - core index']
  #allocation1 [shape = 'u32[144,128]{1,0:T(1,128)}', space=vmem, size = 0x12000, scoped, tag = 'internal scratch']
  %s0 = inlined_call_operand.hbm [shape: f32[8,256], index: 0, kind: input, shape index: {}]
  %s1 = inlined_call_operand.hbm [shape: f32[8,256], index: 1, kind: output, shape index: {}]
  %s2 = sld [smem:[#allocation0]]
  $region18: #{tpu_custom_call.1} parent=0
    _
  %s4 = ssub.s32 1, %s2
  %s5 = scalar_select 0, %s4, %s2
  $region1: #{tpu_custom_call.1} parent=0
    #allocation2 [shape = 'u8[8192]{0}', space=vmem, size = 0x2000, scoped, tag = 'input window, operand 0, single buffered']
    #allocation3 [shape = 's32[1]{0}', space=sflag, size = 0x4, scoped, tag = 'scoped memory for tpu_custom_call.1']
    #allocation4 [shape = 's32[1]{0}', space=sflag, size = 0x4, scoped, tag = 'scoped memory for tpu_custom_call.1']
    #allocation5 [shape = 'u8[8192]{0}', space=vmem, size = 0x2000, scoped, tag = 'output window, operand 0, single buffered']
    %6 = vsyncpa [#allocation3], 0
    %7 = vsyncpa [#allocation4], 0
    // Predicated region
    $region2: #{tpu_custom_call.1} parent=1 // pred_check
      _
    $region3: #{tpu_custom_call.1} parent=1 // pred_check_branch
      %9 = sbr.rel (0) target = $region5
    $region4: #{tpu_custom_call.1} parent=1 // pred_region
      %s11 = ssub.s32 256, 256
      %12 = vsyncadd [#allocation3], %s11
      %s14 = sshll.u32 [#allocation2], 4
      %s15 = int_to_ptr.vmem [resolvable:$true] %s14
      %17 = dma.hbm_to_vmem [thread:$0]  %s0, 256, %s15, [#allocation3]
    $region5: #{tpu_custom_call.1} parent=1 // pred_fallthru
      _
    // Predicated region
    $region6: #{tpu_custom_call.1} parent=1 // pred_check
      _
    $region7: #{tpu_custom_call.1} parent=1 // pred_check_branch
      %19 = sbr.rel (0) target = $region9
    $region8: #{tpu_custom_call.1} parent=1 // pred_region
      %20 = dma.done [#allocation3], 256
    $region9: #{tpu_custom_call.1} parent=1 // pred_fallthru
      _
    %v21 = vld [vmem:[#allocation2] sm:$0xff]
    %v22 = vld [vmem:[#allocation2 + $0x8] sm:$0xff]
    %v23 = vmul.f32 %v21, 0.11111111
    %v24 = vmul.f32 %v22, 0.11111111
    %25 = vst [vmem:[#allocation5] sm:$0xff] %v23
    %26 = vst [vmem:[#allocation5 + $0x8] sm:$0xff] %v24
    // Predicated region
    $region10: #{tpu_custom_call.1} parent=1 // pred_check
      _
    $region11: #{tpu_custom_call.1} parent=1 // pred_check_branch
      %28 = sbr.rel (0) target = $region13
    $region12: #{tpu_custom_call.1} parent=1 // pred_region
      %s30 = ssub.s32 256, 256
      %31 = vsyncadd [#allocation4], %s30
      %s33 = sshll.u32 [#allocation5], 4
      %s34 = int_to_ptr.vmem [resolvable:$true] %s33
      %36 = dma.vmem_to_hbm [thread:$0]  %s34, 256, %s1, [#allocation4]
    $region13: #{tpu_custom_call.1} parent=1 // pred_fallthru
      _
    // Predicated region
    $region14: #{tpu_custom_call.1} parent=1 // pred_check
      _
    $region15: #{tpu_custom_call.1} parent=1 // pred_check_branch
      %38 = sbr.rel (0) target = $region17
    $region16: #{tpu_custom_call.1} parent=1 // pred_region
      %39 = dma.done [#allocation4], 256
    $region17: #{tpu_custom_call.1} parent=1 // pred_fallthru
      _
    %40 = vsyncpa [#allocation3], 1
    %41 = vsyncpa [#allocation4], 1

</llo_original>
